<compile_context>
chip_gen: v7x
topology: tpu7x:2x2x1
jax: 0.10.0
libtpu: 0.0.40
codegen_flags: <defaults>
</compile_context>

<pallas_src>
import functools
import math

import jax
import jax.numpy as jnp
from jax.experimental import pallas as pl
from jax.experimental.pallas import tpu as pltpu

_LANES = 128


def _round_up(a, b):
    return ((a + b - 1) // b) * b


def _vmem_capacity_bytes():
    """Generation-aware VMEM capacity (falls back to the v7x 64 MiB floor)."""
    try:
        info = pltpu.get_tpu_info()
        cap = getattr(info, "vmem_capacity_bytes", None)
        if cap:
            return int(cap)
    except Exception:
        pass
    return 64 * 1024 * 1024


def _dice_kernel(x_ref, t_ref, inter_ref, xsum_ref, tsum_ref, *,
                 d_total, td, kps, rowgroup, need_mask):
    p = pl.program_id(0)          # K-range split (dual-core path), usually size 1
    k = pl.program_id(2)          # reduction axis (last)

    # Zero the resident output accumulators at the start of each (p, i) K-sweep.
    @pl.when(k == 0)
    def _():
        inter_ref[...] = jnp.zeros_like(inter_ref)
        xsum_ref[...] = jnp.zeros_like(xsum_ref)
        tsum_ref[...] = jnp.zeros_like(tsum_ref)

    tn = x_ref.shape[0]
    num_slabs = td // _LANES
    num_rowgroups = tn // rowgroup

    gk = p * kps + k              # global (un-clamped) feature-block index
    rem = d_total - gk * td       # valid feature columns left in this block

    lane = (jax.lax.broadcasted_iota(jnp.int32, (rowgroup, _LANES), 1)
            if need_mask else None)

    def do_rowgroup(r0):
        rows = pl.ds(r0, rowgroup)
        # Only 3 (rowgroup, 128) accumulator vregs live across the slab loop.
        ia = inter_ref[rows, :]
        xa = xsum_ref[rows, :]
        ta = tsum_ref[rows, :]
        for s in range(num_slabs):            # static lane offsets only
            lo = s * _LANES
            x = x_ref[rows, pl.ds(lo, _LANES)].astype(jnp.float32)
            t = t_ref[rows, pl.ds(lo, _LANES)].astype(jnp.float32)
            # sigmoid(x) = 1 / (1 + exp(-x)): exp + approx reciprocal ride the EUP.
            e = jnp.exp(jnp.minimum(-x, 80.0))
            xs = pl.reciprocal(1.0 + e, approx=True)
            if need_mask:
                m = (lane + lo) < rem          # ragged-tail / duplicate-block mask
                xs = jnp.where(m, xs, 0.0)
                t = jnp.where(m, t, 0.0)
            ia = ia + xs * t
            xa = xa + xs
            ta = ta + t
        inter_ref[rows, :] = ia
        xsum_ref[rows, :] = xa
        tsum_ref[rows, :] = ta

    if num_rowgroups == 1:
        do_rowgroup(0)
    else:
        def body(g, carry):
            do_rowgroup(pl.multiple_of(g * rowgroup, rowgroup))
            return carry
        jax.lax.fori_loop(0, num_rowgroups, body, 0)


def dice_with_logit_loss(out, target, eps=1e-6):
    """out, target: [N, C, H, W] (f32 or bf16). Returns scalar f32 loss."""
    assert out.shape == target.shape
    n = out.shape[0]
    d = math.prod(out.shape[1:])

    x2 = out.reshape(n, d)
    t2 = target.reshape(n, d)

    isx = jnp.dtype(out.dtype).itemsize
    ist = jnp.dtype(target.dtype).itemsize
    sub = 8 if min(isx, ist) >= 4 else 16          # sublane tile (16 for 16-bit)
    rowgroup = sub

    # Row tile: balanced across row blocks, multiple of the sublane tile, <=128.
    n_row_blocks = -(-n // 128)
    tn = min(128, _round_up(-(-n // n_row_blocks), sub))

    # Feature tile: lane-aligned, up to ~8 MiB of input bytes per grid step,
    # bounded by ~60% of this generation's VMEM (inputs are double-buffered).
    vmem_cap = _vmem_capacity_bytes()
    vmem_budget = int(vmem_cap * 0.6)
    max_block_bytes = min(8 << 20, vmem_budget // 2)
    td_cap = max(_LANES, (max_block_bytes // (tn * (isx + ist))) // _LANES * _LANES)
    d128 = _round_up(d, _LANES)
    td = min(d128, td_cap, 16384)

    i_blocks = -(-n // tn)
    k_blocks = -(-d // td)

    # Small-batch dual-TensorCore path: split the K (reduction) range per core.
    n_splits = 2 if (i_blocks == 1 and k_blocks >= 2) else 1
    kps = -(-k_blocks // n_splits)
    need_mask = (d % td != 0) or (n_splits * kps != k_blocks)
    rows_out = i_blocks * tn

    def in_index(p, i, k):
        gk = p * kps + k
        if n_splits * kps != k_blocks:
            # Clamp the (duplicate) overflow block; its contribution is fully masked.
            gk = jnp.minimum(gk, k_blocks - 1)
        return (i, gk)

    in_spec = pl.BlockSpec((tn, td), in_index)
    out_spec = pl.BlockSpec((None, tn, _LANES), lambda p, i, k: (p, i, 0))
    out_shape = tuple(
        jax.ShapeDtypeStruct((n_splits, rows_out, _LANES), jnp.float32)
        for _ in range(3))

    vmem_need = 2 * tn * td * (isx + ist) + 3 * 2 * tn * _LANES * 4
    vmem_limit = min(int(vmem_cap * 0.9), max(32 << 20, vmem_need + (4 << 20)))

    kernel = functools.partial(
        _dice_kernel, d_total=d, td=td, kps=kps,
        rowgroup=rowgroup, need_mask=need_mask)

    inter_p, xsum_p, tsum_p = pl.pallas_call(
        kernel,
        out_shape=out_shape,
        grid_spec=pltpu.PrefetchScalarGridSpec(
            num_scalar_prefetch=0,
            grid=(n_splits, i_blocks, kps),
            in_specs=[in_spec, in_spec],
            out_specs=[out_spec, out_spec, out_spec],
        ),
        compiler_params=pltpu.CompilerParams(
            dimension_semantics=("parallel", "parallel", "arbitrary"),
            vmem_limit_bytes=int(vmem_limit),
        ),
    )(x2, t2)

    # Tiny finalization in plain JAX: sum over splits and lanes, slice off the
    # padded row tail, per-sample ratio, mean.
    inter = jnp.sum(inter_p, axis=(0, 2))[:n]
    xsum = jnp.sum(xsum_p, axis=(0, 2))[:n]
    tsum = jnp.sum(tsum_p, axis=(0, 2))[:n]
    ratio = inter / (xsum * tsum + jnp.float32(eps))
    return jnp.float32(1.0) - jnp.float32(2.0) * jnp.mean(ratio)


def _reference(out, target, eps=1e-6):
    o = jax.nn.sigmoid(out.astype(jnp.float32))
    t = target.astype(jnp.float32)
    axes = tuple(range(1, out.ndim))
    inter = jnp.sum(o * t, axis=axes)
    denom = jnp.sum(o, axis=axes) * jnp.sum(t, axis=axes) + eps
    return 1.0 - 2.0 * jnp.mean(inter / denom)


if __name__ == "__main__":
    key = jax.random.PRNGKey(0)
    k1, k2, k3, k4 = jax.random.split(key, 4)

    # Shapes consistent with the module's NCHW forward.
    out = jax.random.normal(k1, (2, 4, 16, 16), dtype=jnp.float32)
    target = (jax.random.uniform(k2, (2, 4, 16, 16)) > 0.5).astype(jnp.float32)

    loss = jax.block_until_ready(dice_with_logit_loss(out, target))
    ref = jax.block_until_ready(_reference(out, target))
    assert jnp.allclose(loss, ref, atol=2e-3, rtol=2e-3), (loss, ref)

    # Ragged C*H*W (not a multiple of 128): exercises the in-kernel tail mask
    # (no wrapper-side padding) and the partial row block.
    out2 = jax.random.normal(k3, (3, 3, 7, 9), dtype=jnp.float32)
    target2 = (jax.random.uniform(k4, (3, 3, 7, 9)) > 0.5).astype(jnp.float32)
    loss2 = jax.block_until_ready(dice_with_logit_loss(out2, target2))
    ref2 = jax.block_until_ready(_reference(out2, target2))
    assert jnp.allclose(loss2, ref2, atol=2e-3, rtol=2e-3), (loss2, ref2)

    print("KERNEL_OK")
</pallas_src>

<mosaic_0001>
module attributes {stable_mosaic.version = 11 : i64} {
  func.func @_dice_kernel(%arg0: i32, %arg1: i32, %arg2: i32, %arg3: memref<8x1024xf32, #tpu.memory_space<vmem>>, %arg4: memref<8x1024xf32, #tpu.memory_space<vmem>>, %arg5: memref<1x8x128xf32, #tpu.memory_space<vmem>>, %arg6: memref<1x8x128xf32, #tpu.memory_space<vmem>>, %arg7: memref<1x8x128xf32, #tpu.memory_space<vmem>>) attributes {dimension_semantics = [#tpu.dimension_semantics<parallel>, #tpu.dimension_semantics<parallel>, #tpu.dimension_semantics<arbitrary>], iteration_bounds = array<i64: 1, 1, 1>, scalar_prefetch = 0 : i64, scratch_operands = 0 : i64, tpu.core_type = #tpu.core_type<tc>, window_params = [{transform_indices = @transform_0, window_bounds = array<i64: 8, 1024>}, {transform_indices = @transform_1, window_bounds = array<i64: 8, 1024>}, {transform_indices = @transform_2, window_bounds = array<i64: 1, 8, 128>}, {transform_indices = @transform_3, window_bounds = array<i64: 1, 8, 128>}, {transform_indices = @transform_4, window_bounds = array<i64: 1, 8, 128>}]} {
    %c0_i32 = arith.constant 0 : i32
    %0 = arith.cmpi eq, %arg2, %c0_i32 : i32
    %1 = arith.extui %0 : i1 to i32
    %c0_i32_0 = arith.constant 0 : i32
    %2 = arith.cmpi ne, %1, %c0_i32_0 : i32
    scf.if %2 {
      %cst_66 = arith.constant 0.000000e+00 : f32
      %130 = vector.broadcast %cst_66 : f32 to vector<8x128xf32>
      %c0_67 = arith.constant 0 : index
      %c0_68 = arith.constant 0 : index
      %c0_69 = arith.constant 0 : index
      %131 = vector.load %arg5[%c0_67, %c0_68, %c0_69] : memref<1x8x128xf32, #tpu.memory_space<vmem>>, vector<1x8x128xf32>
      %132 = vector.shape_cast %131 : vector<1x8x128xf32> to vector<8x128xf32>
      %133 = vector.shape_cast %130 : vector<8x128xf32> to vector<1x8x128xf32>
      tpu.vector_store %arg5[%c0_67, %c0_68, %c0_69], %133 {strides = array<i32>} : memref<1x8x128xf32, #tpu.memory_space<vmem>>, vector<1x8x128xf32>,
      %cst_70 = arith.constant 0.000000e+00 : f32
      %134 = vector.broadcast %cst_70 : f32 to vector<8x128xf32>
      %c0_71 = arith.constant 0 : index
      %c0_72 = arith.constant 0 : index
      %c0_73 = arith.constant 0 : index
      %135 = vector.load %arg6[%c0_71, %c0_72, %c0_73] : memref<1x8x128xf32, #tpu.memory_space<vmem>>, vector<1x8x128xf32>
      %136 = vector.shape_cast %135 : vector<1x8x128xf32> to vector<8x128xf32>
      %137 = vector.shape_cast %134 : vector<8x128xf32> to vector<1x8x128xf32>
      tpu.vector_store %arg6[%c0_71, %c0_72, %c0_73], %137 {strides = array<i32>} : memref<1x8x128xf32, #tpu.memory_space<vmem>>, vector<1x8x128xf32>,
      %cst_74 = arith.constant 0.000000e+00 : f32
      %138 = vector.broadcast %cst_74 : f32 to vector<8x128xf32>
      %c0_75 = arith.constant 0 : index
      %c0_76 = arith.constant 0 : index
      %c0_77 = arith.constant 0 : index
      %139 = vector.load %arg7[%c0_75, %c0_76, %c0_77] : memref<1x8x128xf32, #tpu.memory_space<vmem>>, vector<1x8x128xf32>
      %140 = vector.shape_cast %139 : vector<1x8x128xf32> to vector<8x128xf32>
      %141 = vector.shape_cast %138 : vector<8x128xf32> to vector<1x8x128xf32>
      tpu.vector_store %arg7[%c0_75, %c0_76, %c0_77], %141 {strides = array<i32>} : memref<1x8x128xf32, #tpu.memory_space<vmem>>, vector<1x8x128xf32>,
    } else {
    }
    %c0 = arith.constant 0 : index
    %c0_1 = arith.constant 0 : index
    %c0_2 = arith.constant 0 : index
    %3 = vector.load %arg5[%c0, %c0_1, %c0_2] : memref<1x8x128xf32, #tpu.memory_space<vmem>>, vector<1x8x128xf32>
    %4 = vector.shape_cast %3 : vector<1x8x128xf32> to vector<8x128xf32>
    %c0_3 = arith.constant 0 : index
    %c0_4 = arith.constant 0 : index
    %c0_5 = arith.constant 0 : index
    %5 = vector.load %arg6[%c0_3, %c0_4, %c0_5] : memref<1x8x128xf32, #tpu.memory_space<vmem>>, vector<1x8x128xf32>
    %6 = vector.shape_cast %5 : vector<1x8x128xf32> to vector<8x128xf32>
    %c0_6 = arith.constant 0 : index
    %c0_7 = arith.constant 0 : index
    %c0_8 = arith.constant 0 : index
    %7 = vector.load %arg7[%c0_6, %c0_7, %c0_8] : memref<1x8x128xf32, #tpu.memory_space<vmem>>, vector<1x8x128xf32>
    %8 = vector.shape_cast %7 : vector<1x8x128xf32> to vector<8x128xf32>
    %c0_9 = arith.constant 0 : index
    %c0_10 = arith.constant 0 : index
    %9 = vector.load %arg3[%c0_9, %c0_10] : memref<8x1024xf32, #tpu.memory_space<vmem>>, vector<8x128xf32>
    %c0_11 = arith.constant 0 : index
    %c0_12 = arith.constant 0 : index
    %10 = vector.load %arg4[%c0_11, %c0_12] : memref<8x1024xf32, #tpu.memory_space<vmem>>, vector<8x128xf32>
    %cst = arith.constant 0.000000e+00 : f32
    %11 = vector.broadcast %cst : f32 to vector<8x128xf32>
    %12 = arith.subf %11, %9 : vector<8x128xf32>
    %cst_13 = arith.constant 8.000000e+01 : f32
    %13 = vector.broadcast %cst_13 : f32 to vector<8x128xf32>
    %14 = arith.minimumf %12, %13 : vector<8x128xf32>
    %15 = math.exp %14 : vector<8x128xf32>
    %cst_14 = arith.constant 1.000000e+00 : f32
    %16 = vector.broadcast %cst_14 : f32 to vector<8x128xf32>
    %17 = arith.addf %16, %15 : vector<8x128xf32>
    %18 = tpu.reciprocal %17 {approx = true} : vector<8x128xf32> -> vector<8x128xf32>
    %19 = arith.mulf %18, %10 : vector<8x128xf32>
    %20 = arith.addf %4, %19 : vector<8x128xf32>
    %21 = arith.addf %6, %18 : vector<8x128xf32>
    %22 = arith.addf %8, %10 : vector<8x128xf32>
    %c0_15 = arith.constant 0 : index
    %c128 = arith.constant 128 : index
    %23 = vector.load %arg3[%c0_15, %c128] : memref<8x1024xf32, #tpu.memory_space<vmem>>, vector<8x128xf32>
    %c0_16 = arith.constant 0 : index
    %c128_17 = arith.constant 128 : index
    %24 = vector.load %arg4[%c0_16, %c128_17] : memref<8x1024xf32, #tpu.memory_space<vmem>>, vector<8x128xf32>
    %cst_18 = arith.constant 0.000000e+00 : f32
    %25 = vector.broadcast %cst_18 : f32 to vector<8x128xf32>
    %26 = arith.subf %25, %23 : vector<8x128xf32>
    %cst_19 = arith.constant 8.000000e+01 : f32
    %27 = vector.broadcast %cst_19 : f32 to vector<8x128xf32>
    %28 = arith.minimumf %26, %27 : vector<8x128xf32>
    %29 = math.exp %28 : vector<8x128xf32>
    %cst_20 = arith.constant 1.000000e+00 : f32
    %30 = vector.broadcast %cst_20 : f32 to vector<8x128xf32>
    %31 = arith.addf %30, %29 : vector<8x128xf32>
    %32 = tpu.reciprocal %31 {approx = true} : vector<8x128xf32> -> vector<8x128xf32>
    %33 = arith.mulf %32, %24 : vector<8x128xf32>
    %34 = arith.addf %20, %33 : vector<8x128xf32>
    %35 = arith.addf %21, %32 : vector<8x128xf32>
    %36 = arith.addf %22, %24 : vector<8x128xf32>
    %c0_21 = arith.constant 0 : index
    %c256 = arith.constant 256 : index
    %37 = vector.load %arg3[%c0_21, %c256] : memref<8x1024xf32, #tpu.memory_space<vmem>>, vector<8x128xf32>
    %c0_22 = arith.constant 0 : index
    %c256_23 = arith.constant 256 : index
    %38 = vector.load %arg4[%c0_22, %c256_23] : memref<8x1024xf32, #tpu.memory_space<vmem>>, vector<8x128xf32>
    %cst_24 = arith.constant 0.000000e+00 : f32
    %39 = vector.broadcast %cst_24 : f32 to vector<8x128xf32>
    %40 = arith.subf %39, %37 : vector<8x128xf32>
    %cst_25 = arith.constant 8.000000e+01 : f32
    %41 = vector.broadcast %cst_25 : f32 to vector<8x128xf32>
    %42 = arith.minimumf %40, %41 : vector<8x128xf32>
    %43 = math.exp %42 : vector<8x128xf32>
    %cst_26 = arith.constant 1.000000e+00 : f32
    %44 = vector.broadcast %cst_26 : f32 to vector<8x128xf32>
    %45 = arith.addf %44, %43 : vector<8x128xf32>
    %46 = tpu.reciprocal %45 {approx = true} : vector<8x128xf32> -> vector<8x128xf32>
    %47 = arith.mulf %46, %38 : vector<8x128xf32>
    %48 = arith.addf %34, %47 : vector<8x128xf32>
    %49 = arith.addf %35, %46 : vector<8x128xf32>
    %50 = arith.addf %36, %38 : vector<8x128xf32>
    %c0_27 = arith.constant 0 : index
    %c384 = arith.constant 384 : index
    %51 = vector.load %arg3[%c0_27, %c384] : memref<8x1024xf32, #tpu.memory_space<vmem>>, vector<8x128xf32>
    %c0_28 = arith.constant 0 : index
    %c384_29 = arith.constant 384 : index
    %52 = vector.load %arg4[%c0_28, %c384_29] : memref<8x1024xf32, #tpu.memory_space<vmem>>, vector<8x128xf32>
    %cst_30 = arith.constant 0.000000e+00 : f32
    %53 = vector.broadcast %cst_30 : f32 to vector<8x128xf32>
    %54 = arith.subf %53, %51 : vector<8x128xf32>
    %cst_31 = arith.constant 8.000000e+01 : f32
    %55 = vector.broadcast %cst_31 : f32 to vector<8x128xf32>
    %56 = arith.minimumf %54, %55 : vector<8x128xf32>
    %57 = math.exp %56 : vector<8x128xf32>
    %cst_32 = arith.constant 1.000000e+00 : f32
    %58 = vector.broadcast %cst_32 : f32 to vector<8x128xf32>
    %59 = arith.addf %58, %57 : vector<8x128xf32>
    %60 = tpu.reciprocal %59 {approx = true} : vector<8x128xf32> -> vector<8x128xf32>
    %61 = arith.mulf %60, %52 : vector<8x128xf32>
    %62 = arith.addf %48, %61 : vector<8x128xf32>
    %63 = arith.addf %49, %60 : vector<8x128xf32>
    %64 = arith.addf %50, %52 : vector<8x128xf32>
    %c0_33 = arith.constant 0 : index
    %c512 = arith.constant 512 : index
    %65 = vector.load %arg3[%c0_33, %c512] : memref<8x1024xf32, #tpu.memory_space<vmem>>, vector<8x128xf32>
    %c0_34 = arith.constant 0 : index
    %c512_35 = arith.constant 512 : index
    %66 = vector.load %arg4[%c0_34, %c512_35] : memref<8x1024xf32, #tpu.memory_space<vmem>>, vector<8x128xf32>
    %cst_36 = arith.constant 0.000000e+00 : f32
    %67 = vector.broadcast %cst_36 : f32 to vector<8x128xf32>
    %68 = arith.subf %67, %65 : vector<8x128xf32>
    %cst_37 = arith.constant 8.000000e+01 : f32
    %69 = vector.broadcast %cst_37 : f32 to vector<8x128xf32>
    %70 = arith.minimumf %68, %69 : vector<8x128xf32>
    %71 = math.exp %70 : vector<8x128xf32>
    %cst_38 = arith.constant 1.000000e+00 : f32
    %72 = vector.broadcast %cst_38 : f32 to vector<8x128xf32>
    %73 = arith.addf %72, %71 : vector<8x128xf32>
    %74 = tpu.reciprocal %73 {approx = true} : vector<8x128xf32> -> vector<8x128xf32>
    %75 = arith.mulf %74, %66 : vector<8x128xf32>
    %76 = arith.addf %62, %75 : vector<8x128xf32>
    %77 = arith.addf %63, %74 : vector<8x128xf32>
    %78 = arith.addf %64, %66 : vector<8x128xf32>
    %c0_39 = arith.constant 0 : index
    %c640 = arith.constant 640 : index
    %79 = vector.load %arg3[%c0_39, %c640] : memref<8x1024xf32, #tpu.memory_space<vmem>>, vector<8x128xf32>
    %c0_40 = arith.constant 0 : index
    %c640_41 = arith.constant 640 : index
    %80 = vector.load %arg4[%c0_40, %c640_41] : memref<8x1024xf32, #tpu.memory_space<vmem>>, vector<8x128xf32>
    %cst_42 = arith.constant 0.000000e+00 : f32
    %81 = vector.broadcast %cst_42 : f32 to vector<8x128xf32>
    %82 = arith.subf %81, %79 : vector<8x128xf32>
    %cst_43 = arith.constant 8.000000e+01 : f32
    %83 = vector.broadcast %cst_43 : f32 to vector<8x128xf32>
    %84 = arith.minimumf %82, %83 : vector<8x128xf32>
    %85 = math.exp %84 : vector<8x128xf32>
    %cst_44 = arith.constant 1.000000e+00 : f32
    %86 = vector.broadcast %cst_44 : f32 to vector<8x128xf32>
    %87 = arith.addf %86, %85 : vector<8x128xf32>
    %88 = tpu.reciprocal %87 {approx = true} : vector<8x128xf32> -> vector<8x128xf32>
    %89 = arith.mulf %88, %80 : vector<8x128xf32>
    %90 = arith.addf %76, %89 : vector<8x128xf32>
    %91 = arith.addf %77, %88 : vector<8x128xf32>
    %92 = arith.addf %78, %80 : vector<8x128xf32>
    %c0_45 = arith.constant 0 : index
    %c768 = arith.constant 768 : index
    %93 = vector.load %arg3[%c0_45, %c768] : memref<8x1024xf32, #tpu.memory_space<vmem>>, vector<8x128xf32>
    %c0_46 = arith.constant 0 : index
    %c768_47 = arith.constant 768 : index
    %94 = vector.load %arg4[%c0_46, %c768_47] : memref<8x1024xf32, #tpu.memory_space<vmem>>, vector<8x128xf32>
    %cst_48 = arith.constant 0.000000e+00 : f32
    %95 = vector.broadcast %cst_48 : f32 to vector<8x128xf32>
    %96 = arith.subf %95, %93 : vector<8x128xf32>
    %cst_49 = arith.constant 8.000000e+01 : f32
    %97 = vector.broadcast %cst_49 : f32 to vector<8x128xf32>
    %98 = arith.minimumf %96, %97 : vector<8x128xf32>
    %99 = math.exp %98 : vector<8x128xf32>
    %cst_50 = arith.constant 1.000000e+00 : f32
    %100 = vector.broadcast %cst_50 : f32 to vector<8x128xf32>
    %101 = arith.addf %100, %99 : vector<8x128xf32>
    %102 = tpu.reciprocal %101 {approx = true} : vector<8x128xf32> -> vector<8x128xf32>
    %103 = arith.mulf %102, %94 : vector<8x128xf32>
    %104 = arith.addf %90, %103 : vector<8x128xf32>
    %105 = arith.addf %91, %102 : vector<8x128xf32>
    %106 = arith.addf %92, %94 : vector<8x128xf32>
    %c0_51 = arith.constant 0 : index
    %c896 = arith.constant 896 : index
    %107 = vector.load %arg3[%c0_51, %c896] : memref<8x1024xf32, #tpu.memory_space<vmem>>, vector<8x128xf32>
    %c0_52 = arith.constant 0 : index
    %c896_53 = arith.constant 896 : index
    %108 = vector.load %arg4[%c0_52, %c896_53] : memref<8x1024xf32, #tpu.memory_space<vmem>>, vector<8x128xf32>
    %cst_54 = arith.constant 0.000000e+00 : f32
    %109 = vector.broadcast %cst_54 : f32 to vector<8x128xf32>
    %110 = arith.subf %109, %107 : vector<8x128xf32>
    %cst_55 = arith.constant 8.000000e+01 : f32
    %111 = vector.broadcast %cst_55 : f32 to vector<8x128xf32>
    %112 = arith.minimumf %110, %111 : vector<8x128xf32>
    %113 = math.exp %112 : vector<8x128xf32>
    %cst_56 = arith.constant 1.000000e+00 : f32
    %114 = vector.broadcast %cst_56 : f32 to vector<8x128xf32>
    %115 = arith.addf %114, %113 : vector<8x128xf32>
    %116 = tpu.reciprocal %115 {approx = true} : vector<8x128xf32> -> vector<8x128xf32>
    %117 = arith.mulf %116, %108 : vector<8x128xf32>
    %118 = arith.addf %104, %117 : vector<8x128xf32>
    %119 = arith.addf %105, %116 : vector<8x128xf32>
    %120 = arith.addf %106, %108 : vector<8x128xf32>
    %c0_57 = arith.constant 0 : index
    %c0_58 = arith.constant 0 : index
    %c0_59 = arith.constant 0 : index
    %121 = vector.load %arg5[%c0_57, %c0_58, %c0_59] : memref<1x8x128xf32, #tpu.memory_space<vmem>>, vector<1x8x128xf32>
    %122 = vector.shape_cast %121 : vector<1x8x128xf32> to vector<8x128xf32>
    %123 = vector.shape_cast %118 : vector<8x128xf32> to vector<1x8x128xf32>
    tpu.vector_store %arg5[%c0_57, %c0_58, %c0_59], %123 {strides = array<i32>} : memref<1x8x128xf32, #tpu.memory_space<vmem>>, vector<1x8x128xf32>,
    %c0_60 = arith.constant 0 : index
    %c0_61 = arith.constant 0 : index
    %c0_62 = arith.constant 0 : index
    %124 = vector.load %arg6[%c0_60, %c0_61, %c0_62] : memref<1x8x128xf32, #tpu.memory_space<vmem>>, vector<1x8x128xf32>
    %125 = vector.shape_cast %124 : vector<1x8x128xf32> to vector<8x128xf32>
    %126 = vector.shape_cast %119 : vector<8x128xf32> to vector<1x8x128xf32>
    tpu.vector_store %arg6[%c0_60, %c0_61, %c0_62], %126 {strides = array<i32>} : memref<1x8x128xf32, #tpu.memory_space<vmem>>, vector<1x8x128xf32>,
    %c0_63 = arith.constant 0 : index
    %c0_64 = arith.constant 0 : index
    %c0_65 = arith.constant 0 : index
    %127 = vector.load %arg7[%c0_63, %c0_64, %c0_65] : memref<1x8x128xf32, #tpu.memory_space<vmem>>, vector<1x8x128xf32>
    %128 = vector.shape_cast %127 : vector<1x8x128xf32> to vector<8x128xf32>
    %129 = vector.shape_cast %120 : vector<8x128xf32> to vector<1x8x128xf32>
    tpu.vector_store %arg7[%c0_63, %c0_64, %c0_65], %129 {strides = array<i32>} : memref<1x8x128xf32, #tpu.memory_space<vmem>>, vector<1x8x128xf32>,
    return
  }
  func.func @transform_0(%arg0: i32, %arg1: i32, %arg2: i32) -> (i32, i32) {
    %c1_i32 = arith.constant 1 : i32
    %0 = arith.muli %arg0, %c1_i32 : i32
    %1 = arith.addi %0, %arg2 : i32
    %c0_i32 = arith.constant 0 : i32
    return %arg1, %1 : i32, i32
  }
  func.func @transform_1(%arg0: i32, %arg1: i32, %arg2: i32) -> (i32, i32) {
    %c1_i32 = arith.constant 1 : i32
    %0 = arith.muli %arg0, %c1_i32 : i32
    %1 = arith.addi %0, %arg2 : i32
    %c0_i32 = arith.constant 0 : i32
    return %arg1, %1 : i32, i32
  }
  func.func @transform_2(%arg0: i32, %arg1: i32, %arg2: i32) -> (i32, i32, i32) {
    %c0_i32 = arith.constant 0 : i32
    %c0_i32_0 = arith.constant 0 : i32
    return %arg0, %arg1, %c0_i32 : i32, i32, i32
  }
  func.func @transform_3(%arg0: i32, %arg1: i32, %arg2: i32) -> (i32, i32, i32) {
    %c0_i32 = arith.constant 0 : i32
    %c0_i32_0 = arith.constant 0 : i32
    return %arg0, %arg1, %c0_i32 : i32, i32, i32
  }
  func.func @transform_4(%arg0: i32, %arg1: i32, %arg2: i32) -> (i32, i32, i32) {
    %c0_i32 = arith.constant 0 : i32
    %c0_i32_0 = arith.constant 0 : i32
    return %arg0, %arg1, %c0_i32 : i32, i32, i32
  }
}

</mosaic_0001>

<llo_original>
// kernel: tpu_custom_call.1
$region0: #{tpu_custom_call.1}
  #allocation0 [shape = 'u32[]', space=smem, size = 0x4, offset = 0x4, fixed_abs, tag = 'smem constant byte address 0x4 - core index']
  #allocation1 [shape = 'u32[144,128]{1,0:T(1,128)}', space=vmem, size = 0x12000, scoped, tag = 'internal scratch']
  %s0 = inlined_call_operand.hbm [shape: f32[2,1024], index: 0, kind: input, shape index: {}]
  %s1 = inlined_call_operand.hbm [shape: f32[2,1024], index: 1, kind: input, shape index: {}]
  %s2 = inlined_call_operand.hbm [shape: f32[1,8,128], index: 2, kind: output, shape index: {0}]
  %s3 = inlined_call_operand.hbm [shape: f32[1,8,128], index: 3, kind: output, shape index: {1}]
  %s4 = inlined_call_operand.hbm [shape: f32[1,8,128], index: 4, kind: output, shape index: {2}]
  %5 = xla_tuple %s2, %s3, %s4
  %s6 = sld [smem:[#allocation0]]
  $region46: #{tpu_custom_call.1} parent=0
    _
  %s8 = ssub.s32 1, %s6
  %s9 = scalar_select 0, %s8, %s6
  $region1: #{tpu_custom_call.1} parent=0
    #allocation2 [shape = 'u8[32768]{0}', space=vmem, size = 0x8000, scoped, tag = 'input window, operand 0, single buffered']
    #allocation3 [shape = 's32[1]{0}', space=sflag, size = 0x4, scoped, tag = 'scoped memory for tpu_custom_call.1']
    #allocation4 [shape = 's32[1]{0}', space=sflag, size = 0x4, scoped, tag = 'scoped memory for tpu_custom_call.1']
    #allocation5 [shape = 'u8[32768]{0}', space=vmem, size = 0x8000, scoped, tag = 'input window, operand 1, single buffered']
    #allocation6 [shape = 's32[1]{0}', space=sflag, size = 0x4, scoped, tag = 'scoped memory for tpu_custom_call.1']
    #allocation7 [shape = 'u8[4096]{0}', space=vmem, size = 0x1000, scoped, tag = 'output window, operand 0, single buffered']
    #allocation8 [shape = 'u8[4096]{0}', space=vmem, size = 0x1000, scoped, tag = 'output window, operand 1, single buffered']
    #allocation9 [shape = 's32[1]{0}', space=sflag, size = 0x4, scoped, tag = 'scoped memory for tpu_custom_call.1']
    #allocation10 [shape = 'u8[4096]{0}', space=vmem, size = 0x1000, scoped, tag = 'output window, operand 2, single buffered']
    %10 = vsyncpa [#allocation3], 0
    %11 = vsyncpa [#allocation6], 0
    %12 = vsyncpa [#allocation4], 0
    %13 = vsyncpa [#allocation9], 0
    // Predicated region
    $region2: #{tpu_custom_call.1} parent=1 // pred_check
      _
    $region3: #{tpu_custom_call.1} parent=1 // pred_check_branch
      %15 = sbr.rel (0) target = $region5
    $region4: #{tpu_custom_call.1} parent=1 // pred_region
      %s16 = sadd.s32 0, 0
      %s17 = smul.u32 8, %s16
      %s19 = ssub.s32 1024, 256
      %20 = vsyncadd [#allocation3], %s19
      %s21 = smul.addr %s17, 32
      %s22 = scalar_lea.hbm %s0, %s21
      %s23 = sshll.u32 [#allocation2], 4
      %s24 = int_to_ptr.vmem [resolvable:$true] %s23
      %29 = dma.hbm_to_vmem [thread:$0]  %s22, 256, %s24, [#allocation3], 256, 256, 16
    $region5: #{tpu_custom_call.1} parent=1 // pred_fallthru
      _
    // Predicated region
    $region6: #{tpu_custom_call.1} parent=1 // pred_check
      _
    $region7: #{tpu_custom_call.1} parent=1 // pred_check_branch
      %31 = sbr.rel (0) target = $region9
    $region8: #{tpu_custom_call.1} parent=1 // pred_region
      %s32 = sadd.s32 0, 0
      %s33 = smul.u32 8, %s32
      %s35 = ssub.s32 1024, 256
      %36 = vsyncadd [#allocation6], %s35
      %s37 = smul.addr %s33, 32
      %s38 = scalar_lea.hbm %s1, %s37
      %s39 = sshll.u32 [#allocation5], 4
      %s40 = int_to_ptr.vmem [resolvable:$true] %s39
      %45 = dma.hbm_to_vmem [thread:$0]  %s38, 256, %s40, [#allocation6], 256, 256, 16
    $region9: #{tpu_custom_call.1} parent=1 // pred_fallthru
      _
    // Predicated region
    $region10: #{tpu_custom_call.1} parent=1 // pred_check
      _
    $region11: #{tpu_custom_call.1} parent=1 // pred_check_branch
      %47 = sbr.rel (0) target = $region13
    $region12: #{tpu_custom_call.1} parent=1 // pred_region
      %48 = dma.done [#allocation3], 1024
    $region13: #{tpu_custom_call.1} parent=1 // pred_fallthru
      _
    // Predicated region
    $region14: #{tpu_custom_call.1} parent=1 // pred_check
      _
    $region15: #{tpu_custom_call.1} parent=1 // pred_check_branch
      %50 = sbr.rel (0) target = $region17
    $region16: #{tpu_custom_call.1} parent=1 // pred_region
      %51 = dma.done [#allocation6], 1024
    $region17: #{tpu_custom_call.1} parent=1 // pred_fallthru
      _
    %s52 = sadd.s32 0, 0
    %s53 = smul.u32 8, %s52
    %s54 = sadd.s32 0, 0
    %s55 = smul.u32 8, %s54
    %p56 = scmp.eq.s32.totalorder 0, 0
    // Predicated region
    $region18: #{tpu_custom_call.1} parent=1 // pred_check
      %p57 = pneg %p56
    $region19: #{tpu_custom_call.1} parent=1 // pred_check_branch
      %59 = sbr.rel (%p57) target = $region21
    $region20: #{tpu_custom_call.1} parent=1 // pred_region
      %60 = vst [vmem:[#allocation7] sm:$0xff] 0.0
      %61 = vst [vmem:[#allocation8] sm:$0xff] 0.0
      %62 = vst [vmem:[#allocation10] sm:$0xff] 0.0
    $region21: #{tpu_custom_call.1} parent=1 // pred_fallthru
      _
    %v63 = vld [vmem:[#allocation7] sm:$0xff]
    %v64 = vld [vmem:[#allocation8] sm:$0xff]
    %v65 = vld [vmem:[#allocation10] sm:$0xff]
    %v66 = vld [vmem:[#allocation2] sm:$0x3]
    %v67 = vld [vmem:[#allocation2 + $0x10] sm:$0x3]
    %v68 = vld [vmem:[#allocation2 + $0x20] sm:$0x3]
    %v69 = vld [vmem:[#allocation2 + $0x30] sm:$0x3]
    %v70 = vld [vmem:[#allocation5] sm:$0x3]
    %v71 = vld [vmem:[#allocation5 + $0x10] sm:$0x3]
    %v72 = vld [vmem:[#allocation5 + $0x20] sm:$0x3]
    %v73 = vld [vmem:[#allocation5 + $0x30] sm:$0x3]
    %v74 = vsub.f32 0.0, %v66
    %v75 = vsub.f32 0.0, %v67
    %v76 = vsub.f32 0.0, %v68
    %v77 = vsub.f32 0.0, %v69
    %v78 = vmin.f32 %v74, 80.0
    %v79 = vmin.f32 %v75, 80.0
    %v80 = vmin.f32 %v76, 80.0
    %v81 = vmin.f32 %v77, 80.0
    %v82 = vmul.f32 %v78, 1.442695
    %v83 = vpow.pop %v82
    %v84 = vmul.f32 %v79, 1.442695
    %v85 = vpow.pop %v84
    %v86 = vmul.f32 %v80, 1.442695
    %v87 = vpow.pop %v86
    %v88 = vmul.f32 %v81, 1.442695
    %v89 = vpow.pop %v88
    %v90 = vadd.f32 %v83, 1.0
    %v91 = vadd.f32 %v85, 1.0
    %v92 = vadd.f32 %v87, 1.0
    %v93 = vadd.f32 %v89, 1.0
    %v94 = vrcp.pop %v90
    %v95 = vrcp.pop %v91
    %v96 = vrcp.pop %v92
    %v97 = vrcp.pop %v93
    %v98 = vmul.f32 %v94, %v70
    %v99 = vmul.f32 %v95, %v71
    %v100 = vmul.f32 %v96, %v72
    %v101 = vmul.f32 %v97, %v73
    %v106 = vcombine.low %v98, %v99
    %v107 = vcombine.low %v100, %v101
    %v109 = vunpack.c.l.s4 1983009808
    %v110 = vunpack.c.0.s8 %v109
    %v111 = vlaneseq
    %v112 = vshrl.u32 %v111, 7
    %v113 = vsub.s32 %v110, %v112
    %v114 = vrot.slane %v106, %v113
    %v116 = vunpack.c.l.s4 1983009808
    %v117 = vunpack.c.0.s8 %v116
    %v118 = vlaneseq
    %v119 = vshrl.u32 %v118, 7
    %v120 = vsub.s32 %v117, %v119
    %v121 = vrot.slane %v107, %v120
    %v122 = vcombine.low %v114, %v121
    %v124 = vadd.f32 %v63, %v122
    %v129 = vcombine.low %v94, %v95
    %v130 = vcombine.low %v96, %v97
    %v132 = vunpack.c.l.s4 1983009808
    %v133 = vunpack.c.0.s8 %v132
    %v134 = vlaneseq
    %v135 = vshrl.u32 %v134, 7
    %v136 = vsub.s32 %v133, %v135
    %v137 = vrot.slane %v129, %v136
    %v139 = vunpack.c.l.s4 1983009808
    %v140 = vunpack.c.0.s8 %v139
    %v141 = vlaneseq
    %v142 = vshrl.u32 %v141, 7
    %v143 = vsub.s32 %v140, %v142
    %v144 = vrot.slane %v130, %v143
    %v145 = vcombine.low %v137, %v144
    %v147 = vadd.f32 %v64, %v145
    %v152 = vcombine.low %v70, %v71
    %v153 = vcombine.low %v72, %v73
    %v155 = vunpack.c.l.s4 1983009808
    %v156 = vunpack.c.0.s8 %v155
    %v157 = vlaneseq
    %v158 = vshrl.u32 %v157, 7
    %v159 = vsub.s32 %v156, %v158
    %v160 = vrot.slane %v152, %v159
    %v162 = vunpack.c.l.s4 1983009808
    %v163 = vunpack.c.0.s8 %v162
    %v164 = vlaneseq
    %v165 = vshrl.u32 %v164, 7
    %v166 = vsub.s32 %v163, %v165
    %v167 = vrot.slane %v153, %v166
    %v168 = vcombine.low %v160, %v167
    %v170 = vadd.f32 %v65, %v168
    %v171 = vld [vmem:[#allocation2 + $0x2] sm:$0x3]
    %v172 = vld [vmem:[#allocation2 + $0x12] sm:$0x3]
    %v173 = vld [vmem:[#allocation2 + $0x22] sm:$0x3]
    %v174 = vld [vmem:[#allocation2 + $0x32] sm:$0x3]
    %v175 = vld [vmem:[#allocation5 + $0x2] sm:$0x3]
    %v176 = vld [vmem:[#allocation5 + $0x12] sm:$0x3]
    %v177 = vld [vmem:[#allocation5 + $0x22] sm:$0x3]
    %v178 = vld [vmem:[#allocation5 + $0x32] sm:$0x3]
    %v179 = vsub.f32 0.0, %v171
    %v180 = vsub.f32 0.0, %v172
    %v181 = vsub.f32 0.0, %v173
    %v182 = vsub.f32 0.0, %v174
    %v183 = vmin.f32 %v179, 80.0
    %v184 = vmin.f32 %v180, 80.0
    %v185 = vmin.f32 %v181, 80.0
    %v186 = vmin.f32 %v182, 80.0
    %v187 = vmul.f32 %v183, 1.442695
    %v188 = vpow.pop %v187
    %v189 = vmul.f32 %v184, 1.442695
    %v190 = vpow.pop %v189
    %v191 = vmul.f32 %v185, 1.442695
    %v192 = vpow.pop %v191
    %v193 = vmul.f32 %v186, 1.442695
    %v194 = vpow.pop %v193
    %v195 = vadd.f32 %v188, 1.0
    %v196 = vadd.f32 %v190, 1.0
    %v197 = vadd.f32 %v192, 1.0
    %v198 = vadd.f32 %v194, 1.0
    %v199 = vrcp.pop %v195
    %v200 = vrcp.pop %v196
    %v201 = vrcp.pop %v197
    %v202 = vrcp.pop %v198
    %v203 = vmul.f32 %v199, %v175
    %v204 = vmul.f32 %v200, %v176
    %v205 = vmul.f32 %v201, %v177
    %v206 = vmul.f32 %v202, %v178
    %v211 = vcombine.low %v203, %v204
    %v212 = vcombine.low %v205, %v206
    %v214 = vunpack.c.l.s4 1983009808
    %v215 = vunpack.c.0.s8 %v214
    %v216 = vlaneseq
    %v217 = vshrl.u32 %v216, 7
    %v218 = vsub.s32 %v215, %v217
    %v219 = vrot.slane %v211, %v218
    %v221 = vunpack.c.l.s4 1983009808
    %v222 = vunpack.c.0.s8 %v221
    %v223 = vlaneseq
    %v224 = vshrl.u32 %v223, 7
    %v225 = vsub.s32 %v222, %v224
    %v226 = vrot.slane %v212, %v225
    %v227 = vcombine.low %v219, %v226
    %v229 = vadd.f32 %v124, %v227
    %v234 = vcombine.low %v199, %v200
    %v235 = vcombine.low %v201, %v202
    %v237 = vunpack.c.l.s4 1983009808
    %v238 = vunpack.c.0.s8 %v237
    %v239 = vlaneseq
    %v240 = vshrl.u32 %v239, 7
    %v241 = vsub.s32 %v238, %v240
    %v242 = vrot.slane %v234, %v241
    %v244 = vunpack.c.l.s4 1983009808
    %v245 = vunpack.c.0.s8 %v244
    %v246 = vlaneseq
    %v247 = vshrl.u32 %v246, 7
    %v248 = vsub.s32 %v245, %v247
    %v249 = vrot.slane %v235, %v248
    %v250 = vcombine.low %v242, %v249
    %v252 = vadd.f32 %v147, %v250
    %v257 = vcombine.low %v175, %v176
    %v258 = vcombine.low %v177, %v178
    %v260 = vunpack.c.l.s4 1983009808
    %v261 = vunpack.c.0.s8 %v260
    %v262 = vlaneseq
    %v263 = vshrl.u32 %v262, 7
    %v264 = vsub.s32 %v261, %v263
    %v265 = vrot.slane %v257, %v264
    %v267 = vunpack.c.l.s4 1983009808
    %v268 = vunpack.c.0.s8 %v267
    %v269 = vlaneseq
    %v270 = vshrl.u32 %v269, 7
    %v271 = vsub.s32 %v268, %v270
    %v272 = vrot.slane %v258, %v271
    %v273 = vcombine.low %v265, %v272
    %v275 = vadd.f32 %v170, %v273
    %v276 = vld [vmem:[#allocation2 + $0x4] sm:$0x3]
    %v277 = vld [vmem:[#allocation2 + $0x14] sm:$0x3]
    %v278 = vld [vmem:[#allocation2 + $0x24] sm:$0x3]
    %v279 = vld [vmem:[#allocation2 + $0x34] sm:$0x3]
    %v280 = vld [vmem:[#allocation5 + $0x4] sm:$0x3]
    %v281 = vld [vmem:[#allocation5 + $0x14] sm:$0x3]
    %v282 = vld [vmem:[#allocation5 + $0x24] sm:$0x3]
    %v283 = vld [vmem:[#allocation5 + $0x34] sm:$0x3]
    %v284 = vsub.f32 0.0, %v276
    %v285 = vsub.f32 0.0, %v277
    %v286 = vsub.f32 0.0, %v278
    %v287 = vsub.f32 0.0, %v279
    %v288 = vmin.f32 %v284, 80.0
    %v289 = vmin.f32 %v285, 80.0
    %v290 = vmin.f32 %v286, 80.0
    %v291 = vmin.f32 %v287, 80.0
    %v292 = vmul.f32 %v288, 1.442695
    %v293 = vpow.pop %v292
    %v294 = vmul.f32 %v289, 1.442695
    %v295 = vpow.pop %v294
    %v296 = vmul.f32 %v290, 1.442695
    %v297 = vpow.pop %v296
    %v298 = vmul.f32 %v291, 1.442695
    %v299 = vpow.pop %v298
    %v300 = vadd.f32 %v293, 1.0
    %v301 = vadd.f32 %v295, 1.0
    %v302 = vadd.f32 %v297, 1.0
    %v303 = vadd.f32 %v299, 1.0
    %v304 = vrcp.pop %v300
    %v305 = vrcp.pop %v301
    %v306 = vrcp.pop %v302
    %v307 = vrcp.pop %v303
    %v308 = vmul.f32 %v304, %v280
    %v309 = vmul.f32 %v305, %v281
    %v310 = vmul.f32 %v306, %v282
    %v311 = vmul.f32 %v307, %v283
    %v316 = vcombine.low %v308, %v309
    %v317 = vcombine.low %v310, %v311
    %v319 = vunpack.c.l.s4 1983009808
    %v320 = vunpack.c.0.s8 %v319
    %v321 = vlaneseq
    %v322 = vshrl.u32 %v321, 7
    %v323 = vsub.s32 %v320, %v322
    %v324 = vrot.slane %v316, %v323
    %v326 = vunpack.c.l.s4 1983009808
    %v327 = vunpack.c.0.s8 %v326
    %v328 = vlaneseq
    %v329 = vshrl.u32 %v328, 7
    %v330 = vsub.s32 %v327, %v329
    %v331 = vrot.slane %v317, %v330
    %v332 = vcombine.low %v324, %v331
    %v334 = vadd.f32 %v229, %v332
    %v339 = vcombine.low %v304, %v305
    %v340 = vcombine.low %v306, %v307
    %v342 = vunpack.c.l.s4 1983009808
    %v343 = vunpack.c.0.s8 %v342
    %v344 = vlaneseq
    %v345 = vshrl.u32 %v344, 7
    %v346 = vsub.s32 %v343, %v345
    %v347 = vrot.slane %v339, %v346
    %v349 = vunpack.c.l.s4 1983009808
    %v350 = vunpack.c.0.s8 %v349
    %v351 = vlaneseq
    %v352 = vshrl.u32 %v351, 7
    %v353 = vsub.s32 %v350, %v352
    %v354 = vrot.slane %v340, %v353
    %v355 = vcombine.low %v347, %v354
    %v357 = vadd.f32 %v252, %v355
    %v362 = vcombine.low %v280, %v281
    %v363 = vcombine.low %v282, %v283
    %v365 = vunpack.c.l.s4 1983009808
    %v366 = vunpack.c.0.s8 %v365
    %v367 = vlaneseq
    %v368 = vshrl.u32 %v367, 7
    %v369 = vsub.s32 %v366, %v368
    %v370 = vrot.slane %v362, %v369
    %v372 = vunpack.c.l.s4 1983009808
    %v373 = vunpack.c.0.s8 %v372
    %v374 = vlaneseq
    %v375 = vshrl.u32 %v374, 7
    %v376 = vsub.s32 %v373, %v375
    %v377 = vrot.slane %v363, %v376
    %v378 = vcombine.low %v370, %v377
    %v380 = vadd.f32 %v275, %v378
    %v381 = vld [vmem:[#allocation2 + $0x6] sm:$0x3]
    %v382 = vld [vmem:[#allocation2 + $0x16] sm:$0x3]
    %v383 = vld [vmem:[#allocation2 + $0x26] sm:$0x3]
    %v384 = vld [vmem:[#allocation2 + $0x36] sm:$0x3]
    %v385 = vld [vmem:[#allocation5 + $0x6] sm:$0x3]
    %v386 = vld [vmem:[#allocation5 + $0x16] sm:$0x3]
    %v387 = vld [vmem:[#allocation5 + $0x26] sm:$0x3]
    %v388 = vld [vmem:[#allocation5 + $0x36] sm:$0x3]
    %v389 = vsub.f32 0.0, %v381
    %v390 = vsub.f32 0.0, %v382
    %v391 = vsub.f32 0.0, %v383
    %v392 = vsub.f32 0.0, %v384
    %v393 = vmin.f32 %v389, 80.0
    %v394 = vmin.f32 %v390, 80.0
    %v395 = vmin.f32 %v391, 80.0
    %v396 = vmin.f32 %v392, 80.0
    %v397 = vmul.f32 %v393, 1.442695
    %v398 = vpow.pop %v397
    %v399 = vmul.f32 %v394, 1.442695
    %v400 = vpow.pop %v399
    %v401 = vmul.f32 %v395, 1.442695
    %v402 = vpow.pop %v401
    %v403 = vmul.f32 %v396, 1.442695
    %v404 = vpow.pop %v403
    %v405 = vadd.f32 %v398, 1.0
    %v406 = vadd.f32 %v400, 1.0
    %v407 = vadd.f32 %v402, 1.0
    %v408 = vadd.f32 %v404, 1.0
    %v409 = vrcp.pop %v405
    %v410 = vrcp.pop %v406
    %v411 = vrcp.pop %v407
    %v412 = vrcp.pop %v408
    %v413 = vmul.f32 %v409, %v385
    %v414 = vmul.f32 %v410, %v386
    %v415 = vmul.f32 %v411, %v387
    %v416 = vmul.f32 %v412, %v388
    %v421 = vcombine.low %v413, %v414
    %v422 = vcombine.low %v415, %v416
    %v424 = vunpack.c.l.s4 1983009808
    %v425 = vunpack.c.0.s8 %v424
    %v426 = vlaneseq
    %v427 = vshrl.u32 %v426, 7
    %v428 = vsub.s32 %v425, %v427
    %v429 = vrot.slane %v421, %v428
    %v431 = vunpack.c.l.s4 1983009808
    %v432 = vunpack.c.0.s8 %v431
    %v433 = vlaneseq
    %v434 = vshrl.u32 %v433, 7
    %v435 = vsub.s32 %v432, %v434
    %v436 = vrot.slane %v422, %v435
    %v437 = vcombine.low %v429, %v436
    %v439 = vadd.f32 %v334, %v437
    %v444 = vcombine.low %v409, %v410
    %v445 = vcombine.low %v411, %v412
    %v447 = vunpack.c.l.s4 1983009808
    %v448 = vunpack.c.0.s8 %v447
    %v449 = vlaneseq
    %v450 = vshrl.u32 %v449, 7
    %v451 = vsub.s32 %v448, %v450
    %v452 = vrot.slane %v444, %v451
    %v454 = vunpack.c.l.s4 1983009808
    %v455 = vunpack.c.0.s8 %v454
    %v456 = vlaneseq
    %v457 = vshrl.u32 %v456, 7
    %v458 = vsub.s32 %v455, %v457
    %v459 = vrot.slane %v445, %v458
    %v460 = vcombine.low %v452, %v459
    %v462 = vadd.f32 %v357, %v460
    %v467 = vcombine.low %v385, %v386
    %v468 = vcombine.low %v387, %v388
    %v470 = vunpack.c.l.s4 1983009808
    %v471 = vunpack.c.0.s8 %v470
    %v472 = vlaneseq
    %v473 = vshrl.u32 %v472, 7
    %v474 = vsub.s32 %v471, %v473
    %v475 = vrot.slane %v467, %v474
    %v477 = vunpack.c.l.s4 1983009808
    %v478 = vunpack.c.0.s8 %v477
    %v479 = vlaneseq
    %v480 = vshrl.u32 %v479, 7
    %v481 = vsub.s32 %v478, %v480
    %v482 = vrot.slane %v468, %v481
    %v483 = vcombine.low %v475, %v482
    %v485 = vadd.f32 %v380, %v483
    %v486 = vld [vmem:[#allocation2 + $0x8] sm:$0x3]
    %v487 = vld [vmem:[#allocation2 + $0x18] sm:$0x3]
    %v488 = vld [vmem:[#allocation2 + $0x28] sm:$0x3]
    %v489 = vld [vmem:[#allocation2 + $0x38] sm:$0x3]
    %v490 = vld [vmem:[#allocation5 + $0x8] sm:$0x3]
    %v491 = vld [vmem:[#allocation5 + $0x18] sm:$0x3]
    %v492 = vld [vmem:[#allocation5 + $0x28] sm:$0x3]
    %v493 = vld [vmem:[#allocation5 + $0x38] sm:$0x3]
    %v494 = vsub.f32 0.0, %v486
    %v495 = vsub.f32 0.0, %v487
    %v496 = vsub.f32 0.0, %v488
    %v497 = vsub.f32 0.0, %v489
    %v498 = vmin.f32 %v494, 80.0
    %v499 = vmin.f32 %v495, 80.0
    %v500 = vmin.f32 %v496, 80.0
    %v501 = vmin.f32 %v497, 80.0
    %v502 = vmul.f32 %v498, 1.442695
    %v503 = vpow.pop %v502
    %v504 = vmul.f32 %v499, 1.442695
    %v505 = vpow.pop %v504
    %v506 = vmul.f32 %v500, 1.442695
    %v507 = vpow.pop %v506
    %v508 = vmul.f32 %v501, 1.442695
    %v509 = vpow.pop %v508
    %v510 = vadd.f32 %v503, 1.0
    %v511 = vadd.f32 %v505, 1.0
    %v512 = vadd.f32 %v507, 1.0
    %v513 = vadd.f32 %v509, 1.0
    %v514 = vrcp.pop %v510
    %v515 = vrcp.pop %v511
    %v516 = vrcp.pop %v512
    %v517 = vrcp.pop %v513
    %v518 = vmul.f32 %v514, %v490
    %v519 = vmul.f32 %v515, %v491
    %v520 = vmul.f32 %v516, %v492
    %v521 = vmul.f32 %v517, %v493
    %v526 = vcombine.low %v518, %v519
    %v527 = vcombine.low %v520, %v521
    %v529 = vunpack.c.l.s4 1983009808
    %v530 = vunpack.c.0.s8 %v529
    %v531 = vlaneseq
    %v532 = vshrl.u32 %v531, 7
    %v533 = vsub.s32 %v530, %v532
    %v534 = vrot.slane %v526, %v533
    %v536 = vunpack.c.l.s4 1983009808
    %v537 = vunpack.c.0.s8 %v536
    %v538 = vlaneseq
    %v539 = vshrl.u32 %v538, 7
    %v540 = vsub.s32 %v537, %v539
    %v541 = vrot.slane %v527, %v540
    %v542 = vcombine.low %v534, %v541
    %v544 = vadd.f32 %v439, %v542
    %v549 = vcombine.low %v514, %v515
    %v550 = vcombine.low %v516, %v517
    %v552 = vunpack.c.l.s4 1983009808
    %v553 = vunpack.c.0.s8 %v552
    %v554 = vlaneseq
    %v555 = vshrl.u32 %v554, 7
    %v556 = vsub.s32 %v553, %v555
    %v557 = vrot.slane %v549, %v556
    %v559 = vunpack.c.l.s4 1983009808
    %v560 = vunpack.c.0.s8 %v559
    %v561 = vlaneseq
    %v562 = vshrl.u32 %v561, 7
    %v563 = vsub.s32 %v560, %v562
    %v564 = vrot.slane %v550, %v563
    %v565 = vcombine.low %v557, %v564
    %v567 = vadd.f32 %v462, %v565
    %v572 = vcombine.low %v490, %v491
    %v573 = vcombine.low %v492, %v493
    %v575 = vunpack.c.l.s4 1983009808
    %v576 = vunpack.c.0.s8 %v575
    %v577 = vlaneseq
    %v578 = vshrl.u32 %v577, 7
    %v579 = vsub.s32 %v576, %v578
    %v580 = vrot.slane %v572, %v579
    %v582 = vunpack.c.l.s4 1983009808
    %v583 = vunpack.c.0.s8 %v582
    %v584 = vlaneseq
    %v585 = vshrl.u32 %v584, 7
    %v586 = vsub.s32 %v583, %v585
    %v587 = vrot.slane %v573, %v586
    %v588 = vcombine.low %v580, %v587
    %v590 = vadd.f32 %v485, %v588
    %v591 = vld [vmem:[#allocation2 + $0xa] sm:$0x3]
    %v592 = vld [vmem:[#allocation2 + $0x1a] sm:$0x3]
    %v593 = vld [vmem:[#allocation2 + $0x2a] sm:$0x3]
    %v594 = vld [vmem:[#allocation2 + $0x3a] sm:$0x3]
    %v595 = vld [vmem:[#allocation5 + $0xa] sm:$0x3]
    %v596 = vld [vmem:[#allocation5 + $0x1a] sm:$0x3]
    %v597 = vld [vmem:[#allocation5 + $0x2a] sm:$0x3]
    %v598 = vld [vmem:[#allocation5 + $0x3a] sm:$0x3]
    %v599 = vsub.f32 0.0, %v591
    %v600 = vsub.f32 0.0, %v592
    %v601 = vsub.f32 0.0, %v593
    %v602 = vsub.f32 0.0, %v594
    %v603 = vmin.f32 %v599, 80.0
    %v604 = vmin.f32 %v600, 80.0
    %v605 = vmin.f32 %v601, 80.0
    %v606 = vmin.f32 %v602, 80.0
    %v607 = vmul.f32 %v603, 1.442695
    %v608 = vpow.pop %v607
    %v609 = vmul.f32 %v604, 1.442695
    %v610 = vpow.pop %v609
    %v611 = vmul.f32 %v605, 1.442695
    %v612 = vpow.pop %v611
    %v613 = vmul.f32 %v606, 1.442695
    %v614 = vpow.pop %v613
    %v615 = vadd.f32 %v608, 1.0
    %v616 = vadd.f32 %v610, 1.0
    %v617 = vadd.f32 %v612, 1.0
    %v618 = vadd.f32 %v614, 1.0
    %v619 = vrcp.pop %v615
    %v620 = vrcp.pop %v616
    %v621 = vrcp.pop %v617
    %v622 = vrcp.pop %v618
    %v623 = vmul.f32 %v619, %v595
    %v624 = vmul.f32 %v620, %v596
    %v625 = vmul.f32 %v621, %v597
    %v626 = vmul.f32 %v622, %v598
    %v631 = vcombine.low %v623, %v624
    %v632 = vcombine.low %v625, %v626
    %v634 = vunpack.c.l.s4 1983009808
    %v635 = vunpack.c.0.s8 %v634
    %v636 = vlaneseq
    %v637 = vshrl.u32 %v636, 7
    %v638 = vsub.s32 %v635, %v637
    %v639 = vrot.slane %v631, %v638
    %v641 = vunpack.c.l.s4 1983009808
    %v642 = vunpack.c.0.s8 %v641
    %v643 = vlaneseq
    %v644 = vshrl.u32 %v643, 7
    %v645 = vsub.s32 %v642, %v644
    %v646 = vrot.slane %v632, %v645
    %v647 = vcombine.low %v639, %v646
    %v649 = vadd.f32 %v544, %v647
    %v654 = vcombine.low %v619, %v620
    %v655 = vcombine.low %v621, %v622
    %v657 = vunpack.c.l.s4 1983009808
    %v658 = vunpack.c.0.s8 %v657
    %v659 = vlaneseq
    %v660 = vshrl.u32 %v659, 7
    %v661 = vsub.s32 %v658, %v660
    %v662 = vrot.slane %v654, %v661
    %v664 = vunpack.c.l.s4 1983009808
    %v665 = vunpack.c.0.s8 %v664
    %v666 = vlaneseq
    %v667 = vshrl.u32 %v666, 7
    %v668 = vsub.s32 %v665, %v667
    %v669 = vrot.slane %v655, %v668
    %v670 = vcombine.low %v662, %v669
    %v672 = vadd.f32 %v567, %v670
    %v677 = vcombine.low %v595, %v596
    %v678 = vcombine.low %v597, %v598
    %v680 = vunpack.c.l.s4 1983009808
    %v681 = vunpack.c.0.s8 %v680
    %v682 = vlaneseq
    %v683 = vshrl.u32 %v682, 7
    %v684 = vsub.s32 %v681, %v683
    %v685 = vrot.slane %v677, %v684
    %v687 = vunpack.c.l.s4 1983009808
    %v688 = vunpack.c.0.s8 %v687
    %v689 = vlaneseq
    %v690 = vshrl.u32 %v689, 7
    %v691 = vsub.s32 %v688, %v690
    %v692 = vrot.slane %v678, %v691
    %v693 = vcombine.low %v685, %v692
    %v695 = vadd.f32 %v590, %v693
    %v696 = vld [vmem:[#allocation2 + $0xc] sm:$0x3]
    %v697 = vld [vmem:[#allocation2 + $0x1c] sm:$0x3]
    %v698 = vld [vmem:[#allocation2 + $0x2c] sm:$0x3]
    %v699 = vld [vmem:[#allocation2 + $0x3c] sm:$0x3]
    %v700 = vld [vmem:[#allocation5 + $0xc] sm:$0x3]
    %v701 = vld [vmem:[#allocation5 + $0x1c] sm:$0x3]
    %v702 = vld [vmem:[#allocation5 + $0x2c] sm:$0x3]
    %v703 = vld [vmem:[#allocation5 + $0x3c] sm:$0x3]
    %v704 = vsub.f32 0.0, %v696
    %v705 = vsub.f32 0.0, %v697
    %v706 = vsub.f32 0.0, %v698
    %v707 = vsub.f32 0.0, %v699
    %v708 = vmin.f32 %v704, 80.0
    %v709 = vmin.f32 %v705, 80.0
    %v710 = vmin.f32 %v706, 80.0
    %v711 = vmin.f32 %v707, 80.0
    %v712 = vmul.f32 %v708, 1.442695
    %v713 = vpow.pop %v712
    %v714 = vmul.f32 %v709, 1.442695
    %v715 = vpow.pop %v714
    %v716 = vmul.f32 %v710, 1.442695
    %v717 = vpow.pop %v716
    %v718 = vmul.f32 %v711, 1.442695
    %v719 = vpow.pop %v718
    %v720 = vadd.f32 %v713, 1.0
    %v721 = vadd.f32 %v715, 1.0
    %v722 = vadd.f32 %v717, 1.0
    %v723 = vadd.f32 %v719, 1.0
    %v724 = vrcp.pop %v720
    %v725 = vrcp.pop %v721
    %v726 = vrcp.pop %v722
    %v727 = vrcp.pop %v723
    %v728 = vmul.f32 %v724, %v700
    %v729 = vmul.f32 %v725, %v701
    %v730 = vmul.f32 %v726, %v702
    %v731 = vmul.f32 %v727, %v703
    %v736 = vcombine.low %v728, %v729
    %v737 = vcombine.low %v730, %v731
    %v739 = vunpack.c.l.s4 1983009808
    %v740 = vunpack.c.0.s8 %v739
    %v741 = vlaneseq
    %v742 = vshrl.u32 %v741, 7
    %v743 = vsub.s32 %v740, %v742
    %v744 = vrot.slane %v736, %v743
    %v746 = vunpack.c.l.s4 1983009808
    %v747 = vunpack.c.0.s8 %v746
    %v748 = vlaneseq
    %v749 = vshrl.u32 %v748, 7
    %v750 = vsub.s32 %v747, %v749
    %v751 = vrot.slane %v737, %v750
    %v752 = vcombine.low %v744, %v751
    %v754 = vadd.f32 %v649, %v752
    %v759 = vcombine.low %v724, %v725
    %v760 = vcombine.low %v726, %v727
    %v762 = vunpack.c.l.s4 1983009808
    %v763 = vunpack.c.0.s8 %v762
    %v764 = vlaneseq
    %v765 = vshrl.u32 %v764, 7
    %v766 = vsub.s32 %v763, %v765
    %v767 = vrot.slane %v759, %v766
    %v769 = vunpack.c.l.s4 1983009808
    %v770 = vunpack.c.0.s8 %v769
    %v771 = vlaneseq
    %v772 = vshrl.u32 %v771, 7
    %v773 = vsub.s32 %v770, %v772
    %v774 = vrot.slane %v760, %v773
    %v775 = vcombine.low %v767, %v774
    %v777 = vadd.f32 %v672, %v775
    %v782 = vcombine.low %v700, %v701
    %v783 = vcombine.low %v702, %v703
    %v785 = vunpack.c.l.s4 1983009808
    %v786 = vunpack.c.0.s8 %v785
    %v787 = vlaneseq
    %v788 = vshrl.u32 %v787, 7
    %v789 = vsub.s32 %v786, %v788
    %v790 = vrot.slane %v782, %v789
    %v792 = vunpack.c.l.s4 1983009808
    %v793 = vunpack.c.0.s8 %v792
    %v794 = vlaneseq
    %v795 = vshrl.u32 %v794, 7
    %v796 = vsub.s32 %v793, %v795
    %v797 = vrot.slane %v783, %v796
    %v798 = vcombine.low %v790, %v797
    %v800 = vadd.f32 %v695, %v798
    %v801 = vld [vmem:[#allocation2 + $0xe] sm:$0x3]
    %v802 = vld [vmem:[#allocation2 + $0x1e] sm:$0x3]
    %v803 = vld [vmem:[#allocation2 + $0x2e] sm:$0x3]
    %v804 = vld [vmem:[#allocation2 + $0x3e] sm:$0x3]
    %v805 = vld [vmem:[#allocation5 + $0xe] sm:$0x3]
    %v806 = vld [vmem:[#allocation5 + $0x1e] sm:$0x3]
    %v807 = vld [vmem:[#allocation5 + $0x2e] sm:$0x3]
    %v808 = vld [vmem:[#allocation5 + $0x3e] sm:$0x3]
    %v809 = vsub.f32 0.0, %v801
    %v810 = vsub.f32 0.0, %v802
    %v811 = vsub.f32 0.0, %v803
    %v812 = vsub.f32 0.0, %v804
    %v813 = vmin.f32 %v809, 80.0
    %v814 = vmin.f32 %v810, 80.0
    %v815 = vmin.f32 %v811, 80.0
    %v816 = vmin.f32 %v812, 80.0
    %v817 = vmul.f32 %v813, 1.442695
    %v818 = vpow.pop %v817
    %v819 = vmul.f32 %v814, 1.442695
    %v820 = vpow.pop %v819
    %v821 = vmul.f32 %v815, 1.442695
    %v822 = vpow.pop %v821
    %v823 = vmul.f32 %v816, 1.442695
    %v824 = vpow.pop %v823
    %v825 = vadd.f32 %v818, 1.0
    %v826 = vadd.f32 %v820, 1.0
    %v827 = vadd.f32 %v822, 1.0
    %v828 = vadd.f32 %v824, 1.0
    %v829 = vrcp.pop %v825
    %v830 = vrcp.pop %v826
    %v831 = vrcp.pop %v827
    %v832 = vrcp.pop %v828
    %v833 = vmul.f32 %v829, %v805
    %v834 = vmul.f32 %v830, %v806
    %v835 = vmul.f32 %v831, %v807
    %v836 = vmul.f32 %v832, %v808
    %v841 = vcombine.low %v833, %v834
    %v842 = vcombine.low %v835, %v836
    %v844 = vunpack.c.l.s4 1983009808
    %v845 = vunpack.c.0.s8 %v844
    %v846 = vlaneseq
    %v847 = vshrl.u32 %v846, 7
    %v848 = vsub.s32 %v845, %v847
    %v849 = vrot.slane %v841, %v848
    %v851 = vunpack.c.l.s4 1983009808
    %v852 = vunpack.c.0.s8 %v851
    %v853 = vlaneseq
    %v854 = vshrl.u32 %v853, 7
    %v855 = vsub.s32 %v852, %v854
    %v856 = vrot.slane %v842, %v855
    %v857 = vcombine.low %v849, %v856
    %v859 = vadd.f32 %v754, %v857
    %v864 = vcombine.low %v829, %v830
    %v865 = vcombine.low %v831, %v832
    %v867 = vunpack.c.l.s4 1983009808
    %v868 = vunpack.c.0.s8 %v867
    %v869 = vlaneseq
    %v870 = vshrl.u32 %v869, 7
    %v871 = vsub.s32 %v868, %v870
    %v872 = vrot.slane %v864, %v871
    %v874 = vunpack.c.l.s4 1983009808
    %v875 = vunpack.c.0.s8 %v874
    %v876 = vlaneseq
    %v877 = vshrl.u32 %v876, 7
    %v878 = vsub.s32 %v875, %v877
    %v879 = vrot.slane %v865, %v878
    %v880 = vcombine.low %v872, %v879
    %v882 = vadd.f32 %v777, %v880
    %v887 = vcombine.low %v805, %v806
    %v888 = vcombine.low %v807, %v808
    %v890 = vunpack.c.l.s4 1983009808
    %v891 = vunpack.c.0.s8 %v890
    %v892 = vlaneseq
    %v893 = vshrl.u32 %v892, 7
    %v894 = vsub.s32 %v891, %v893
    %v895 = vrot.slane %v887, %v894
    %v897 = vunpack.c.l.s4 1983009808
    %v898 = vunpack.c.0.s8 %v897
    %v899 = vlaneseq
    %v900 = vshrl.u32 %v899, 7
    %v901 = vsub.s32 %v898, %v900
    %v902 = vrot.slane %v888, %v901
    %v903 = vcombine.low %v895, %v902
    %v905 = vadd.f32 %v800, %v903
    %906 = vst [vmem:[#allocation7] sm:$0xff] %v859
    %907 = vst [vmem:[#allocation8] sm:$0xff] %v882
    %908 = vst [vmem:[#allocation10] sm:$0xff] %v905
    // Predicated region
    $region22: #{tpu_custom_call.1} parent=1 // pred_check
      _
    $region23: #{tpu_custom_call.1} parent=1 // pred_check_branch
      %910 = sbr.rel (0) target = $region25
    $region24: #{tpu_custom_call.1} parent=1 // pred_region
      %s912 = ssub.s32 128, 128
      %913 = vsyncadd [#allocation4], %s912
      %s915 = sshll.u32 [#allocation7], 4
      %s916 = int_to_ptr.vmem [resolvable:$true] %s915
      %918 = dma.vmem_to_hbm [thread:$0]  %s916, 128, %s2, [#allocation4]
    $region25: #{tpu_custom_call.1} parent=1 // pred_fallthru
      _
    // Predicated region
    $region26: #{tpu_custom_call.1} parent=1 // pred_check
      _
    $region27: #{tpu_custom_call.1} parent=1 // pred_check_branch
      %920 = sbr.rel (0) target = $region29
    $region28: #{tpu_custom_call.1} parent=1 // pred_region
      %s922 = ssub.s32 128, 128
      %923 = vsyncadd [#allocation9], %s922
      %s925 = sshll.u32 [#allocation8], 4
      %s926 = int_to_ptr.vmem [resolvable:$true] %s925
      %928 = dma.vmem_to_hbm [thread:$0]  %s926, 128, %s3, [#allocation9]
    $region29: #{tpu_custom_call.1} parent=1 // pred_fallthru
      _
    // Predicated region
    $region30: #{tpu_custom_call.1} parent=1 // pred_check
      _
    $region31: #{tpu_custom_call.1} parent=1 // pred_check_branch
      %930 = sbr.rel (0) target = $region33
    $region32: #{tpu_custom_call.1} parent=1 // pred_region
      %s932 = ssub.s32 128, 128
      %933 = vsyncadd [#allocation9], %s932
      %s935 = sshll.u32 [#allocation10], 4
      %s936 = int_to_ptr.vmem [resolvable:$true] %s935
      %938 = dma.vmem_to_hbm [thread:$0]  %s936, 128, %s4, [#allocation9]
    $region33: #{tpu_custom_call.1} parent=1 // pred_fallthru
      _
    // Predicated region
    $region34: #{tpu_custom_call.1} parent=1 // pred_check
      _
    $region35: #{tpu_custom_call.1} parent=1 // pred_check_branch
      %940 = sbr.rel (0) target = $region37
    $region36: #{tpu_custom_call.1} parent=1 // pred_region
      %941 = dma.done [#allocation4], 128
    $region37: #{tpu_custom_call.1} parent=1 // pred_fallthru
      _
    // Predicated region
    $region38: #{tpu_custom_call.1} parent=1 // pred_check
      _
    $region39: #{tpu_custom_call.1} parent=1 // pred_check_branch
      %943 = sbr.rel (0) target = $region41
    $region40: #{tpu_custom_call.1} parent=1 // pred_region
      %944 = dma.done [#allocation9], 128
    $region41: #{tpu_custom_call.1} parent=1 // pred_fallthru
      _
    // Predicated region
    $region42: #{tpu_custom_call.1} parent=1 // pred_check
      _
    $region43: #{tpu_custom_call.1} parent=1 // pred_check_branch
      %946 = sbr.rel (0) target = $region45
    $region44: #{tpu_custom_call.1} parent=1 // pred_region
      %947 = dma.done [#allocation9], 128
    $region45: #{tpu_custom_call.1} parent=1 // pred_fallthru
      _
    %948 = vsyncpa [#allocation3], 1
    %949 = vsyncpa [#allocation6], 1
    %950 = vsyncpa [#allocation4], 1
    %951 = vsyncpa [#allocation9], 1

</llo_original>
